<compile_context>
chip_gen: v7x
topology: tpu7x:2x2x1
jax: 0.10.0
libtpu: 0.0.40
codegen_flags: <defaults>
</compile_context>

<pallas_src>
import math
import functools

import jax
import jax.numpy as jnp
from jax import lax
from jax.experimental import pallas as pl
from jax.experimental.pallas import tpu as pltpu


# ------------------------------ tiling helpers ------------------------------

def _pick_tile(dim, target, align):
    """Largest block <= target that divides `dim` and is a multiple of `align`;
    falls back to the full dimension (always a legal Pallas TPU block)."""
    if dim <= target:
        return dim
    t = (target // align) * align
    while t >= align:
        if dim % t == 0:
            return t
        t -= align
    return dim


def _pick_head_block(num_heads, bytes_per_head, budget=4 << 20):
    """Largest divisor of num_heads whose per-step working set fits the budget."""
    for hb in range(num_heads, 0, -1):
        if num_heads % hb == 0 and hb * bytes_per_head <= budget:
            return hb
    return 1


# ------------------------------ tiled matmul --------------------------------

def _matmul_kernel(x_ref, w_ref, o_ref, acc_ref):
    @pl.when(pl.program_id(2) == 0)
    def _init():
        acc_ref[...] = jnp.zeros(acc_ref.shape, acc_ref.dtype)

    # Native-dtype operands (bf16 stays bf16); f32 MXU accumulator.
    acc_ref[...] += jnp.dot(x_ref[...], w_ref[...],
                            preferred_element_type=jnp.float32)

    @pl.when(pl.program_id(2) == pl.num_programs(2) - 1)
    def _store():
        o_ref[...] = acc_ref[...].astype(o_ref.dtype)


def pallas_matmul(x, w, *, tm_target=256, tn_target=256, tk_target=512):
    """y = x @ w with a pipelined, accumulated, megacore-friendly grid."""
    m, k = x.shape
    k2, n = w.shape
    assert k == k2
    tm = _pick_tile(m, tm_target, 8)
    tn = _pick_tile(n, tn_target, 128)
    tk = _pick_tile(k, tk_target, 128)
    grid = (m // tm, n // tn, k // tk)
    return pl.pallas_call(
        _matmul_kernel,
        out_shape=jax.ShapeDtypeStruct((m, n), x.dtype),
        grid=grid,
        in_specs=[
            pl.BlockSpec((tm, tk), lambda i, j, kk: (i, kk)),
            pl.BlockSpec((tk, tn), lambda i, j, kk: (kk, j)),
        ],
        out_specs=pl.BlockSpec((tm, tn), lambda i, j, kk: (i, j)),
        scratch_shapes=[pltpu.VMEM((tm, tn), jnp.float32)],
        compiler_params=pltpu.CompilerParams(
            dimension_semantics=("parallel", "parallel", "arbitrary"),
            vmem_limit_bytes=32 * 1024 * 1024,
        ),
    )(x, w)


# --------------------------- flash attention kernel -------------------------

def _flash_attn_kernel(q_ref, k_ref, v_ref, o_ref, m_ref, l_ref, acc_ref, *,
                       scale, causal, kv_offset, kv_tile, head_block,
                       approx_recip):
    # q_ref: (head_block, Sq, Dk)   k_ref/v_ref: (head_block, kv_tile, Dk)
    kv_idx = pl.program_id(2)

    @pl.when(kv_idx == 0)
    def _init():
        m_ref[...] = jnp.full(m_ref.shape, -jnp.inf, m_ref.dtype)
        l_ref[...] = jnp.zeros(l_ref.shape, l_ref.dtype)
        acc_ref[...] = jnp.zeros(acc_ref.shape, acc_ref.dtype)

    sq = q_ref.shape[1]
    if causal:
        col_start = kv_idx * kv_tile
        row = lax.broadcasted_iota(jnp.int32, (sq, kv_tile), 0)
        col = lax.broadcasted_iota(jnp.int32, (sq, kv_tile), 1)
        # matches torch.tril(ones(Sk, Sk))[-Sq:, :] with Sk = kv_offset + Sq
        valid = (col + col_start) <= (row + kv_offset)

    for h in range(head_block):
        # Fold 1/sqrt(d_k) into the (Sq, Dk) Q tile, not the (Sq, Sk) scores.
        qh = q_ref[h] * jnp.asarray(scale, q_ref.dtype)
        kh = k_ref[h]
        vh = v_ref[h]
        # Contract the last dims of both operands -> K stays un-transposed.
        s = lax.dot_general(qh, kh, (((1,), (1,)), ((), ())),
                            preferred_element_type=jnp.float32)  # (Sq, kv_tile)
        if causal:
            s = jnp.where(valid, s, -jnp.inf)

        m_prev = m_ref[h]                                          # (Sq, 1)
        l_prev = l_ref[h]
        m_new = jnp.maximum(m_prev, jnp.max(s, axis=-1, keepdims=True))
        alpha = jnp.exp(m_prev - m_new)
        p = jnp.exp(s - m_new)
        l_ref[h] = alpha * l_prev + jnp.sum(p, axis=-1, keepdims=True)
        m_ref[h] = m_new
        pv = jnp.dot(p.astype(vh.dtype), vh,
                     preferred_element_type=jnp.float32)           # (Sq, Dk)
        acc_ref[h] = alpha * acc_ref[h] + pv

    @pl.when(kv_idx == pl.num_programs(2) - 1)
    def _finalize():
        for h in range(head_block):
            inv = pl.reciprocal(l_ref[h], approx=approx_recip)
            o_ref[h] = (acc_ref[h] * inv).astype(o_ref.dtype)


def pallas_flash_attention(q, k, v, *, causal, kv_tile_target=512):
    # q: (B, H, Sq, Dk)   k, v: (B, H, Sk, Dk)
    b, nh, sq, dk = q.shape
    sk = k.shape[2]
    kv_tile = _pick_tile(sk, kv_tile_target, 8)
    itemsize = jnp.dtype(q.dtype).itemsize
    # rough per-head VMEM: double-buffered q/k/v tiles + f32 accumulator
    bytes_per_head = 2 * (sq + 2 * kv_tile) * dk * itemsize + 2 * sq * dk * 4
    head_block = _pick_head_block(nh, bytes_per_head)
    grid = (b, nh // head_block, sk // kv_tile)

    kernel = functools.partial(
        _flash_attn_kernel,
        scale=1.0 / math.sqrt(dk),
        causal=causal,
        kv_offset=sk - sq,
        kv_tile=kv_tile,
        head_block=head_block,
        approx_recip=jnp.dtype(q.dtype) != jnp.float32,
    )
    return pl.pallas_call(
        kernel,
        out_shape=jax.ShapeDtypeStruct((b, nh, sq, dk), q.dtype),
        grid=grid,
        in_specs=[
            pl.BlockSpec((None, head_block, sq, dk),
                         lambda bi, hi, ki: (bi, hi, 0, 0)),
            pl.BlockSpec((None, head_block, kv_tile, dk),
                         lambda bi, hi, ki: (bi, hi, ki, 0)),
            pl.BlockSpec((None, head_block, kv_tile, dk),
                         lambda bi, hi, ki: (bi, hi, ki, 0)),
        ],
        out_specs=pl.BlockSpec((None, head_block, sq, dk),
                               lambda bi, hi, ki: (bi, hi, 0, 0)),
        scratch_shapes=[
            pltpu.VMEM((head_block, sq, 1), jnp.float32),   # running max
            pltpu.VMEM((head_block, sq, 1), jnp.float32),   # running sum
            pltpu.VMEM((head_block, sq, dk), jnp.float32),  # output accumulator
        ],
        compiler_params=pltpu.CompilerParams(
            dimension_semantics=("parallel", "parallel", "arbitrary"),
            vmem_limit_bytes=32 * 1024 * 1024,
        ),
    )(q, k, v)


# ------------------------------- model forward ------------------------------

def mqa_forward(q, k, v, params, num_heads, groups, mask=False, kv_cache=None):
    b, sq, d_model = q.shape
    d_k = d_model // num_heads
    hpg = num_heads // groups

    def project(x, w):
        bb, ss, dd = x.shape
        return pallas_matmul(x.reshape(bb * ss, dd), w).reshape(bb, ss, w.shape[1])

    def to_heads(x):  # (b, s, d_model) -> (b, H, s, d_k)
        bb, ss, _ = x.shape
        return x.reshape(bb, ss, num_heads, d_k).transpose(0, 2, 1, 3)

    # ---- projections (QKV fused into a single matmul for self-attention) ----
    if (q is k) and (k is v):
        w_qkv = jnp.concatenate([params["Wq"], params["Wk"], params["Wv"]], axis=1)
        qkv = project(q, w_qkv)                               # (b, s, 3*d_model)
        q_proj, k_proj, v_proj = jnp.split(qkv, 3, axis=-1)
    else:
        q_proj = project(q, params["Wq"])
        k_proj = project(k, params["Wk"])
        v_proj = project(v, params["Wv"])

    q_h = to_heads(q_proj)
    k_h = to_heads(k_proj)
    v_h = to_heads(v_proj)

    if kv_cache is not None:
        cache_k, cache_v = kv_cache   # (b, groups, hpg, Lc, d_k)
        k_h = jnp.concatenate(
            [cache_k.reshape(b, num_heads, -1, d_k), k_h], axis=2)
        v_h = jnp.concatenate(
            [cache_v.reshape(b, num_heads, -1, d_k), v_h], axis=2)
    # TODO(synk): for decode loops, keep a preallocated max-length cache and
    # update it in place via input_output_aliases; the module's API requires
    # returning a freshly concatenated (key, value), so the concat stays here.

    out_h = pallas_flash_attention(q_h, k_h, v_h, causal=bool(mask))

    out = out_h.transpose(0, 2, 1, 3).reshape(b * sq, d_model)
    out = pallas_matmul(out, params["Wo"]).reshape(b, sq, d_model)

    sk = k_h.shape[2]
    new_key = k_h.reshape(b, groups, hpg, sk, d_k)
    new_value = v_h.reshape(b, groups, hpg, sk, d_k)
    return out, (new_key, new_value)


# ----------------------------- pure-JAX reference ----------------------------

def mqa_reference(q, k, v, params, num_heads, groups, mask=False, kv_cache=None):
    b, sq, d_model = q.shape
    d_k = d_model // num_heads
    hpg = num_heads // groups

    def reshape_qkv(x):
        bb, ss, _ = x.shape
        x = x.reshape(bb, ss, groups, hpg, d_k)
        return jnp.transpose(x, (0, 2, 3, 1, 4))

    query = reshape_qkv(q @ params["Wq"])
    key = reshape_qkv(k @ params["Wk"])
    value = reshape_qkv(v @ params["Wv"])
    if kv_cache is not None:
        cache_k, cache_v = kv_cache
        key = jnp.concatenate([cache_k, key], axis=3)
        value = jnp.concatenate([cache_v, value], axis=3)

    s = query @ jnp.swapaxes(key, -1, -2) / math.sqrt(d_k)
    if mask:
        sk = key.shape[3]
        tri = jnp.tril(jnp.ones((sk, sk)))[-sq:, :]
        s = jnp.where(tri == 0, -jnp.inf, s)
    attn = jax.nn.softmax(s, axis=-1)
    out = attn @ value
    out = jnp.transpose(out, (0, 3, 1, 2, 4)).reshape(b, sq, d_model)
    return out @ params["Wo"], (key, value)


# ----------------------------------- main ------------------------------------

if __name__ == "__main__":
    d_model, num_heads, groups = 32, 4, 2
    d_k = d_model // num_heads
    hpg = num_heads // groups
    b, sq, cache_len = 2, 8, 4

    key0 = jax.random.PRNGKey(0)
    ks = jax.random.split(key0, 10)
    wscale = 1.0 / math.sqrt(d_model)

    # synthetic, deterministic weights; stored as (d_in, d_out)
    params = {
        "Wq": jax.random.normal(ks[0], (d_model, d_model), jnp.float32) * wscale,
        "Wk": jax.random.normal(ks[1], (d_model, d_model), jnp.float32) * wscale,
        "Wv": jax.random.normal(ks[2], (d_model, d_model), jnp.float32) * wscale,
        "Wo": jax.random.normal(ks[3], (d_model, d_model), jnp.float32) * wscale,
    }

    q_in = jax.random.normal(ks[4], (b, sq, d_model), jnp.float32)
    k_in = jax.random.normal(ks[5], (b, sq, d_model), jnp.float32)
    v_in = jax.random.normal(ks[6], (b, sq, d_model), jnp.float32)
    cache_k = jax.random.normal(ks[7], (b, groups, hpg, cache_len, d_k), jnp.float32)
    cache_v = jax.random.normal(ks[8], (b, groups, hpg, cache_len, d_k), jnp.float32)

    # Case 1: distinct q/k/v, KV cache, causal mask.
    out, (new_k, new_v) = mqa_forward(
        q_in, k_in, v_in, params, num_heads, groups,
        mask=True, kv_cache=(cache_k, cache_v),
    )
    jax.block_until_ready(out)
    jax.block_until_ready(new_k)
    jax.block_until_ready(new_v)

    ref_out, (ref_k, ref_v) = mqa_reference(
        q_in, k_in, v_in, params, num_heads, groups,
        mask=True, kv_cache=(cache_k, cache_v),
    )
    assert out.shape == (b, sq, d_model)
    assert new_k.shape == (b, groups, hpg, cache_len + sq, d_k)
    assert jnp.allclose(out, ref_out, atol=1e-3, rtol=1e-3)
    assert jnp.allclose(new_k, ref_k, atol=1e-3, rtol=1e-3)
    assert jnp.allclose(new_v, ref_v, atol=1e-3, rtol=1e-3)

    # Case 2: self-attention (exercises the fused-QKV projection path).
    x_in = jax.random.normal(ks[9], (b, sq, d_model), jnp.float32)
    out2, (k2, v2) = mqa_forward(
        x_in, x_in, x_in, params, num_heads, groups, mask=False, kv_cache=None,
    )
    jax.block_until_ready(out2)
    ref_out2, (ref_k2, ref_v2) = mqa_reference(
        x_in, x_in, x_in, params, num_heads, groups, mask=False, kv_cache=None,
    )
    assert out2.shape == (b, sq, d_model)
    assert k2.shape == (b, groups, hpg, sq, d_k)
    assert jnp.allclose(out2, ref_out2, atol=1e-3, rtol=1e-3)
    assert jnp.allclose(k2, ref_k2, atol=1e-3, rtol=1e-3)
    assert jnp.allclose(v2, ref_v2, atol=1e-3, rtol=1e-3)

    print("KERNEL_OK")
</pallas_src>

<mosaic_0001>
module attributes {stable_mosaic.version = 11 : i64} {
  func.func @_matmul_kernel(%arg0: i32, %arg1: i32, %arg2: i32, %arg3: memref<16x32xf32, #tpu.memory_space<vmem>>, %arg4: memref<32x32xf32, #tpu.memory_space<vmem>>, %arg5: memref<16x32xf32, #tpu.memory_space<vmem>>, %arg6: memref<16x32xf32, #tpu.memory_space<vmem>>) attributes {dimension_semantics = [#tpu.dimension_semantics<parallel>, #tpu.dimension_semantics<parallel>, #tpu.dimension_semantics<arbitrary>], iteration_bounds = array<i64: 1, 1, 1>, scalar_prefetch = 0 : i64, scratch_operands = 1 : i64, tpu.core_type = #tpu.core_type<tc>, window_params = [{transform_indices = @transform_0, window_bounds = array<i64: 16, 32>}, {transform_indices = @transform_1, window_bounds = array<i64: 32, 32>}, {transform_indices = @transform_2, window_bounds = array<i64: 16, 32>}]} {
    %c0_i32 = arith.constant 0 : i32
    %0 = arith.cmpi eq, %arg2, %c0_i32 : i32
    %1 = arith.extui %0 : i1 to i32
    %c0_i32_0 = arith.constant 0 : i32
    %2 = arith.cmpi ne, %1, %c0_i32_0 : i32
    scf.if %2 {
      %cst_10 = arith.constant 0.000000e+00 : f32
      %12 = vector.broadcast %cst_10 : f32 to vector<16x32xf32>
      %c0_11 = arith.constant 0 : index
      %c0_12 = arith.constant 0 : index
      %13 = vector.load %arg6[%c0_11, %c0_12] : memref<16x32xf32, #tpu.memory_space<vmem>>, vector<16x32xf32>
      tpu.vector_store %arg6[%c0_11, %c0_12], %12 {strides = array<i32>} : memref<16x32xf32, #tpu.memory_space<vmem>>, vector<16x32xf32>,
    } else {
    }
    %c0 = arith.constant 0 : index
    %c0_1 = arith.constant 0 : index
    %3 = vector.load %arg6[%c0, %c0_1] : memref<16x32xf32, #tpu.memory_space<vmem>>, vector<16x32xf32>
    %c0_2 = arith.constant 0 : index
    %c0_3 = arith.constant 0 : index
    %4 = vector.load %arg3[%c0_2, %c0_3] : memref<16x32xf32, #tpu.memory_space<vmem>>, vector<16x32xf32>
    %c0_4 = arith.constant 0 : index
    %c0_5 = arith.constant 0 : index
    %5 = vector.load %arg4[%c0_4, %c0_5] : memref<32x32xf32, #tpu.memory_space<vmem>>, vector<32x32xf32>
    %cst = arith.constant dense<0.000000e+00> : vector<16x32xf32>
    %6 = tpu.matmul %4, %5, %cst {dimension_numbers = #tpu.dot_dimension_numbers<[1], [0], [0], [1], [0, 0, 1, 1], [], []>} : vector<16x32xf32>, vector<32x32xf32>, vector<16x32xf32> -> vector<16x32xf32>
    %7 = arith.addf %3, %6 : vector<16x32xf32>
    %c0_6 = arith.constant 0 : index
    %c0_7 = arith.constant 0 : index
    %8 = vector.load %arg6[%c0_6, %c0_7] : memref<16x32xf32, #tpu.memory_space<vmem>>, vector<16x32xf32>
    tpu.vector_store %arg6[%c0_6, %c0_7], %7 {strides = array<i32>} : memref<16x32xf32, #tpu.memory_space<vmem>>, vector<16x32xf32>,
    %c0_i32_8 = arith.constant 0 : i32
    %9 = arith.cmpi eq, %arg2, %c0_i32_8 : i32
    %10 = arith.extui %9 : i1 to i32
    %c0_i32_9 = arith.constant 0 : i32
    %11 = arith.cmpi ne, %10, %c0_i32_9 : i32
    scf.if %11 {
      %c0_10 = arith.constant 0 : index
      %c0_11 = arith.constant 0 : index
      %12 = vector.load %arg6[%c0_10, %c0_11] : memref<16x32xf32, #tpu.memory_space<vmem>>, vector<16x32xf32>
      %c0_12 = arith.constant 0 : index
      %c0_13 = arith.constant 0 : index
      %13 = vector.load %arg5[%c0_12, %c0_13] : memref<16x32xf32, #tpu.memory_space<vmem>>, vector<16x32xf32>
      tpu.vector_store %arg5[%c0_12, %c0_13], %12 {strides = array<i32>} : memref<16x32xf32, #tpu.memory_space<vmem>>, vector<16x32xf32>,
    } else {
    }
    return
  }
  func.func @transform_0(%arg0: i32, %arg1: i32, %arg2: i32) -> (i32, i32) {
    %c0_i32 = arith.constant 0 : i32
    return %arg0, %arg2 : i32, i32
  }
  func.func @transform_1(%arg0: i32, %arg1: i32, %arg2: i32) -> (i32, i32) {
    %c0_i32 = arith.constant 0 : i32
    return %arg2, %arg1 : i32, i32
  }
  func.func @transform_2(%arg0: i32, %arg1: i32, %arg2: i32) -> (i32, i32) {
    %c0_i32 = arith.constant 0 : i32
    return %arg0, %arg1 : i32, i32
  }
}

</mosaic_0001>

<llo_original>
// kernel: tpu_custom_call.1
$region0: #{tpu_custom_call.1}
  #allocation0 [shape = 'u32[]', space=smem, size = 0x4, offset = 0x4, fixed_abs, tag = 'smem constant byte address 0x4 - core index']
  #allocation1 [shape = 'u32[144,128]{1,0:T(1,128)}', space=vmem, size = 0x12000, scoped, tag = 'internal scratch']
  #allocation2 [shape = 'f32[16,32]{1,0:T(8,128)}', space=vmem, size = 0x2000, scoped, tag = 'scratch operand']
  %s0 = inlined_call_operand.hbm [shape: f32[16,32], index: 0, kind: input, shape index: {}]
  %s1 = inlined_call_operand.hbm [shape: f32[32,32], index: 1, kind: input, shape index: {}]
  %s2 = inlined_call_operand.hbm [shape: f32[16,32], index: 2, kind: output, shape index: {}]
  %s3 = sld [smem:[#allocation0]]
  $region34: #{tpu_custom_call.1} parent=0
    _
  %s5 = ssub.s32 1, %s3
  %s6 = scalar_select 0, %s5, %s3
  $region1: #{tpu_custom_call.1} parent=0
    #allocation3 [shape = 'u8[8192]{0}', space=vmem, size = 0x2000, scoped, tag = 'input window, operand 0, single buffered']
    #allocation4 [shape = 's32[1]{0}', space=sflag, size = 0x4, scoped, tag = 'scoped memory for tpu_custom_call.1']
    #allocation5 [shape = 's32[1]{0}', space=sflag, size = 0x4, scoped, tag = 'scoped memory for tpu_custom_call.1']
    #allocation6 [shape = 'u8[16384]{0}', space=vmem, size = 0x4000, scoped, tag = 'input window, operand 1, single buffered']
    #allocation7 [shape = 's32[1]{0}', space=sflag, size = 0x4, scoped, tag = 'scoped memory for tpu_custom_call.1']
    #allocation8 [shape = 'u8[8192]{0}', space=vmem, size = 0x2000, scoped, tag = 'output window, operand 0, single buffered']
    %7 = vsyncpa [#allocation4], 0
    %8 = vsyncpa [#allocation7], 0
    %9 = vsyncpa [#allocation5], 0
    // Predicated region
    $region2: #{tpu_custom_call.1} parent=1 // pred_check
      _
    $region3: #{tpu_custom_call.1} parent=1 // pred_check_branch
      %11 = sbr.rel (0) target = $region5
    $region4: #{tpu_custom_call.1} parent=1 // pred_region
      %s13 = ssub.s32 256, 256
      %14 = vsyncadd [#allocation4], %s13
      %s15 = sshll.u32 [#allocation3], 4
      %s16 = int_to_ptr.vmem [resolvable:$true] %s15
      %21 = dma.hbm_to_vmem [thread:$0]  %s0, 256, %s16, [#allocation4], 128, 128, 8
    $region5: #{tpu_custom_call.1} parent=1 // pred_fallthru
      _
    // Predicated region
    $region6: #{tpu_custom_call.1} parent=1 // pred_check
      _
    $region7: #{tpu_custom_call.1} parent=1 // pred_check_branch
      %23 = sbr.rel (0) target = $region9
    $region8: #{tpu_custom_call.1} parent=1 // pred_region
      %s25 = ssub.s32 512, 512
      %26 = vsyncadd [#allocation7], %s25
      %s27 = sshll.u32 [#allocation6], 4
      %s28 = int_to_ptr.vmem [resolvable:$true] %s27
      %33 = dma.hbm_to_vmem [thread:$0]  %s1, 512, %s28, [#allocation7], 128, 128, 8
    $region9: #{tpu_custom_call.1} parent=1 // pred_fallthru
      _
    // Predicated region
    $region10: #{tpu_custom_call.1} parent=1 // pred_check
      _
    $region11: #{tpu_custom_call.1} parent=1 // pred_check_branch
      %35 = sbr.rel (0) target = $region13
    $region12: #{tpu_custom_call.1} parent=1 // pred_region
      %36 = dma.done [#allocation4], 256
    $region13: #{tpu_custom_call.1} parent=1 // pred_fallthru
      _
    // Predicated region
    $region14: #{tpu_custom_call.1} parent=1 // pred_check
      _
    $region15: #{tpu_custom_call.1} parent=1 // pred_check_branch
      %38 = sbr.rel (0) target = $region17
    $region16: #{tpu_custom_call.1} parent=1 // pred_region
      %39 = dma.done [#allocation7], 512
    $region17: #{tpu_custom_call.1} parent=1 // pred_fallthru
      _
    %p40 = scmp.eq.s32.totalorder 0, 0
    // Predicated region
    $region18: #{tpu_custom_call.1} parent=1 // pred_check
      %p41 = pneg %p40
    $region19: #{tpu_custom_call.1} parent=1 // pred_check_branch
      %43 = sbr.rel (%p41) target = $region21
    $region20: #{tpu_custom_call.1} parent=1 // pred_region
      %vm44 = vcmask 261120
      %45 = vst.msk [vmem:[#allocation2] sm:$0xff] %vm44, 0.0
      %46 = vst.msk [vmem:[#allocation2 + $0x8] sm:$0xff] %vm44, 0.0
    $region21: #{tpu_custom_call.1} parent=1 // pred_fallthru
      _
    %v47 = vld [vmem:[#allocation2] sm:$0xff]
    %v48 = vld [vmem:[#allocation2 + $0x8] sm:$0xff]
    %v49 = vld [vmem:[#allocation3] sm:$0xff]
    %v50 = vld [vmem:[#allocation3 + $0x8] sm:$0xff]
    %v51 = vld [vmem:[#allocation6] sm:$0xff]
    %v52 = vld [vmem:[#allocation6 + $0x8] sm:$0xff]
    %v53 = vld [vmem:[#allocation6 + $0x10] sm:$0xff]
    %v54 = vld [vmem:[#allocation6 + $0x18] sm:$0xff]
    %vm55 = vcmask 261120
    %v57 = vsel %vm55, %v49, 0
    %v60 = vsel %vm55, %v50, 0
    %62 = vmatprep.subr.mxu0 0.0
    %63 = vmatpush1.msra.mxu0 %v51
    %64 = vmatprep.subr.mxu0 0.0
    %65 = vmatpush1.msra.mxu0 %v52
    %66 = vmatprep.subr.mxu0 0.0
    %67 = vmatpush1.msra.mxu0 %v53
    %68 = vmatprep.subr.mxu0 0.0
    %69 = vmatpush1.msra.mxu0 %v54
    %70 = vmatprep.subr.mxu0 0.0
    %71 = vmatpush1.msra.mxu0 0.0
    %72 = vmatprep.subr.mxu0 0.0
    %73 = vmatpush1.msra.mxu0 0.0
    %74 = vmatprep.subr.mxu0 0.0
    %75 = vmatpush1.msra.mxu0 0.0
    %76 = vmatprep.subr.mxu0 0.0
    %77 = vmatpush1.msra.mxu0 0.0
    %78 = vmatprep.subr.mxu0 0.0
    %79 = vmatpush1.msra.mxu0 0.0
    %80 = vmatprep.subr.mxu0 0.0
    %81 = vmatpush1.msra.mxu0 0.0
    %82 = vmatprep.subr.mxu0 0.0
    %83 = vmatpush1.msra.mxu0 0.0
    %84 = vmatprep.subr.mxu0 0.0
    %85 = vmatpush1.msra.mxu0 0.0
    %86 = vmatprep.subr.mxu0 0.0
    %87 = vmatpush1.msra.mxu0 0.0
    %88 = vmatprep.subr.mxu0 0.0
    %89 = vmatpush1.msra.mxu0 0.0
    %90 = vmatprep.subr.mxu0 0.0
    %91 = vmatpush1.msra.mxu0 0.0
    %92 = vmatprep.subr.mxu0 0.0
    %93 = vmatpush1.msra.mxu0 0.0
    %94 = vmatprep.subr.mxu0 0.0
    %95 = vmatpush1.msra.mxu0 0.0
    %96 = vmatprep.subr.mxu0 0.0
    %97 = vmatpush1.msra.mxu0 0.0
    %98 = vmatprep.subr.mxu0 0.0
    %99 = vmatpush1.msra.mxu0 0.0
    %100 = vmatprep.subr.mxu0 0.0
    %101 = vmatpush1.msra.mxu0 0.0
    %102 = vmatprep.subr.mxu0 0.0
    %103 = vmatpush1.msra.mxu0 0.0
    %104 = vmatprep.subr.mxu0 0.0
    %105 = vmatpush1.msra.mxu0 0.0
    %106 = vmatprep.subr.mxu0 0.0
    %107 = vmatpush1.msra.mxu0 0.0
    %108 = vmatprep.subr.mxu0 0.0
    %109 = vmatpush1.msra.mxu0 0.0
    %110 = vmatprep.subr.mxu0 0.0
    %111 = vmatpush1.msra.mxu0 0.0
    %112 = vmatprep.subr.mxu0 0.0
    %113 = vmatpush1.msra.mxu0 0.0
    %114 = vmatprep.subr.mxu0 0.0
    %115 = vmatpush1.msra.mxu0 0.0
    %116 = vmatprep.subr.mxu0 0.0
    %117 = vmatpush1.msra.mxu0 0.0
    %118 = vmatprep.subr.mxu0 0.0
    %119 = vmatpush1.msra.mxu0 0.0
    %120 = vmatprep.subr.mxu0 0.0
    %121 = vmatpush1.msra.mxu0 0.0
    %122 = vmatprep.subr.mxu0 0.0
    %123 = vmatpush1.msra.mxu0 0.0
    %124 = vmatprep.subr.mxu0 0.0
    %125 = vmatpush1.msra.mxu0 0.0
    %126 = vmatprep.mubr.f32.mxu0 0.0
    %127 = vmatmul.mubr.f32.gmra.mrb[0].mxu0 %v57
    %v128 = vpop.f32.mrb[0].mxu0
    %v129 = vadd.f32 0.0, %v128
    %v130 = vpop.f32.mrb[0].mxu0
    %131 = vmatprep.mubr.f32.mxu0 0.0
    %132 = vmatmul.mubr.f32.gmra.mrb[0].mxu0 %v60
    %v133 = vpop.f32.mrb[0].mxu0
    %v134 = vadd.f32 0.0, %v133
    %v135 = vpop.f32.mrb[0].mxu0
    %136 = vdwg.mxu0
    %v137 = vadd.f32 %v47, %v129
    %v138 = vadd.f32 %v48, %v134
    %139 = vst.msk [vmem:[#allocation2] sm:$0xff] %vm55, %v137
    %140 = vst.msk [vmem:[#allocation2 + $0x8] sm:$0xff] %vm55, %v138
    // Predicated region
    $region22: #{tpu_custom_call.1} parent=1 // pred_check
      %p141 = pneg %p40
    $region23: #{tpu_custom_call.1} parent=1 // pred_check_branch
      %143 = sbr.rel (%p141) target = $region25
    $region24: #{tpu_custom_call.1} parent=1 // pred_region
      %v144 = vld [vmem:[#allocation2] sm:$0xff]
      %v145 = vld [vmem:[#allocation2 + $0x8] sm:$0xff]
      %146 = vst.msk [vmem:[#allocation8] sm:$0xff] %vm55, %v144
      %147 = vst.msk [vmem:[#allocation8 + $0x8] sm:$0xff] %vm55, %v145
    $region25: #{tpu_custom_call.1} parent=1 // pred_fallthru
      _
    // Predicated region
    $region26: #{tpu_custom_call.1} parent=1 // pred_check
      _
    $region27: #{tpu_custom_call.1} parent=1 // pred_check_branch
      %149 = sbr.rel (0) target = $region29
    $region28: #{tpu_custom_call.1} parent=1 // pred_region
      %s151 = ssub.s32 256, 256
      %152 = vsyncadd [#allocation5], %s151
      %s153 = sshll.u32 [#allocation8], 4
      %s154 = int_to_ptr.vmem [resolvable:$true] %s153
      %159 = dma.vmem_to_hbm [thread:$0]  %s154, 256, %s2, [#allocation5], 128, 128, 8
    $region29: #{tpu_custom_call.1} parent=1 // pred_fallthru
      _
    // Predicated region
    $region30: #{tpu_custom_call.1} parent=1 // pred_check
      _
    $region31: #{tpu_custom_call.1} parent=1 // pred_check_branch
      %161 = sbr.rel (0) target = $region33
    $region32: #{tpu_custom_call.1} parent=1 // pred_region
      %162 = dma.done [#allocation5], 256
    $region33: #{tpu_custom_call.1} parent=1 // pred_fallthru
      _
    %163 = vsyncpa [#allocation4], 1
    %164 = vsyncpa [#allocation7], 1
    %165 = vsyncpa [#allocation5], 1

</llo_original>
